<compile_context>
chip_gen: v7x
topology: tpu7x:2x2x1
jax: 0.10.0
libtpu: 0.0.40
codegen_flags: <defaults>
</compile_context>

<pallas_src>
import functools
import math

import jax
import jax.numpy as jnp
from jax import lax
from jax.experimental import pallas as pl
from jax.experimental.pallas import tpu as pltpu


def _round_up(a: int, b: int) -> int:
    return (a + b - 1) // b * b


_INV_SQRT2 = 1.0 / math.sqrt(2.0)


def _gelu_f32(g, approximate: bool):
    if approximate:
        # tanh approximation -> EUP slot (cheap on v5e's VALU); ~1e-3 off exact.
        c = jnp.float32(math.sqrt(2.0 / math.pi))
        return 0.5 * g * (1.0 + jnp.tanh(c * (g + jnp.float32(0.044715) * g * g * g)))
    # torch.nn.GELU default: exact erf.
    return 0.5 * g * (1.0 + lax.erf(g * jnp.float32(_INV_SQRT2)))


# --------------------------------------------------------------------------
# Kernels
# --------------------------------------------------------------------------
def _glu_resident_kernel(x_ref, wx_ref, wg_ref, bx_ref, bg_ref, o_ref,
                         *, approximate):
    """Row-tile kernel; full value/gate weights are VMEM-resident (constant index)."""
    xb = x_ref[...].astype(wx_ref.dtype)          # in-kernel bf16 cast (VPU)
    v = jnp.dot(xb, wx_ref[...], preferred_element_type=jnp.float32) + bx_ref[...]
    g = jnp.dot(xb, wg_ref[...], preferred_element_type=jnp.float32) + bg_ref[...]
    o_ref[...] = (v * _gelu_f32(g, approximate)).astype(o_ref.dtype)


def _glu_tiled_kernel(x_ref, wx_ref, wg_ref, bx_ref, bg_ref, o_ref,
                      accv_ref, accg_ref, *, approximate):
    """(row, col, K) tiled kernel with f32 VMEM accumulators over the K axis."""
    k = pl.program_id(2)

    @pl.when(k == 0)
    def _():
        accv_ref[...] = jnp.zeros_like(accv_ref)
        accg_ref[...] = jnp.zeros_like(accg_ref)

    xb = x_ref[...].astype(wx_ref.dtype)
    accv_ref[...] += jnp.dot(xb, wx_ref[...], preferred_element_type=jnp.float32)
    accg_ref[...] += jnp.dot(xb, wg_ref[...], preferred_element_type=jnp.float32)

    @pl.when(k == pl.num_programs(2) - 1)
    def _():
        v = accv_ref[...] + bx_ref[...]
        g = accg_ref[...] + bg_ref[...]
        o_ref[...] = (v * _gelu_f32(g, approximate)).astype(o_ref.dtype)


# --------------------------------------------------------------------------
# Parameter preparation (call ONCE per layer)
# --------------------------------------------------------------------------
def prepare_glu_params(weight, bias, dim_out, *, compute_dtype=jnp.bfloat16):
    """Split/transpose/pad/cast PyTorch-layout Linear params for the kernel.

    weight: (2*dim_out, dim_in) nn.Linear layout; bias: (2*dim_out,) or None.
    """
    proj_out, dim_in = weight.shape
    assert proj_out == 2 * dim_out, "weight must be (2*dim_out, dim_in)"
    if bias is None:
        bias = jnp.zeros((proj_out,), dtype=weight.dtype)

    dim_in_p = _round_up(dim_in, 128)
    dim_out_p = _round_up(dim_out, 128)
    pad_k = dim_in_p - dim_in
    pad_n = dim_out_p - dim_out

    w_x = jnp.pad(weight[:dim_out, :].T, ((0, pad_k), (0, pad_n))).astype(compute_dtype)
    w_g = jnp.pad(weight[dim_out:, :].T, ((0, pad_k), (0, pad_n))).astype(compute_dtype)
    b_x = jnp.pad(bias[:dim_out], (0, pad_n)).reshape(1, dim_out_p).astype(jnp.float32)
    b_g = jnp.pad(bias[dim_out:], (0, pad_n)).reshape(1, dim_out_p).astype(jnp.float32)

    return dict(w_x=w_x, w_g=w_g, b_x=b_x, b_g=b_g,
                dim_in=dim_in, dim_in_p=dim_in_p,
                dim_out=dim_out, dim_out_p=dim_out_p)


# --------------------------------------------------------------------------
# Forward
# --------------------------------------------------------------------------
def _vmem_capacity_bytes() -> int:
    try:
        return int(pltpu.get_tpu_info().vmem_capacity_bytes)
    except Exception:
        return 64 * 1024 * 1024   # conservative fallback (v7x per-TC VMEM)


def glu_forward(x, params, *, tm=None, out_dtype=None, strategy=None,
                approximate_gelu=False):
    """Channel-last GLU forward. x: (..., dim_in) -> (..., dim_out).

    strategy: None/"auto" (default), "resident" (full weight in VMEM, 1-D grid)
              or "tiled" (column/row/K tiled grid).
    """
    if strategy not in (None, "auto", "resident", "tiled"):
        raise ValueError(f"bad strategy: {strategy}")

    w_x, w_g, b_x, b_g = params["w_x"], params["w_g"], params["b_x"], params["b_g"]
    dim_in, dim_in_p = params["dim_in"], params["dim_in_p"]
    dim_out, dim_out_p = params["dim_out"], params["dim_out_p"]

    out_dtype = jnp.dtype(x.dtype if out_dtype is None else out_dtype)
    x_size = jnp.dtype(x.dtype).itemsize
    w_size = jnp.dtype(w_x.dtype).itemsize
    out_size = out_dtype.itemsize

    lead = x.shape[:-1]
    assert x.shape[-1] == dim_in
    M = int(math.prod(lead)) if lead else 1

    # ---- per-chip budgets -------------------------------------------------
    cap = _vmem_capacity_bytes()                 # 128 MiB v5e/v6e, 64 MiB v7x/TC
    budget = int(cap * 0.75)                     # headroom for compiler scratch
    k_target = 4096 if cap <= (64 << 20) else 8192

    # ---- tile sizes ---------------------------------------------------------
    tn = next(t for t in (512, 384, 256, 128) if dim_out_p % t == 0)
    if dim_in_p <= k_target:
        tk = dim_in_p
    else:   # largest 128-multiple divisor of dim_in_p that is <= k_target
        tk = max(t for t in range(128, k_target + 1, 128) if dim_in_p % t == 0)
    nk = dim_in_p // tk

    tm_target = tm if tm is not None else (1024 if cap >= (96 << 20) else 512)
    tm_start = max(16, min(_round_up(tm_target, 16), _round_up(M, 16)))

    # double-buffered working-set estimates (incl. f32 intermediates / scratch)
    def need_resident(tm_):
        return (2 * (tm_ * dim_in_p * x_size
                     + 2 * dim_in_p * dim_out_p * w_size
                     + 2 * dim_out_p * 4
                     + tm_ * dim_out_p * out_size)
                + 2 * tm_ * dim_out_p * 4)

    def need_tiled(tm_, tk_):
        return (2 * (tm_ * tk_ * x_size
                     + 2 * tk_ * tn * w_size
                     + 2 * tn * 4
                     + tm_ * tn * out_size)
                + 2 * tm_ * tn * 4)

    # resident-weight path: requires the whole (padded) weight + tiles in VMEM.
    use_resident = False
    tm_res = tm_start
    if nk == 1 and strategy in (None, "auto", "resident"):
        while tm_res > 16 and need_resident(tm_res) > budget:
            tm_res = max(16, _round_up(tm_res // 2, 16))
        fits = need_resident(tm_res) <= budget
        use_resident = (strategy == "resident") or (fits and tm_res >= min(128, tm_start))

    # tiled path sizing (used when the weight does not fit / K is split).
    tm_t, tk_t, nk_t = tm_start, tk, nk
    while tm_t > 16 and need_tiled(tm_t, tk_t) > budget:
        tm_t = max(16, _round_up(tm_t // 2, 16))
    while need_tiled(tm_t, tk_t) > budget and tk_t > 128:
        cand = [t for t in range(128, tk_t, 128)
                if dim_in_p % t == 0 and t <= tk_t // 2]
        if not cand:
            break
        tk_t = max(cand)
        nk_t = dim_in_p // tk_t

    if use_resident:
        tm_eff = tm_res
        need = need_resident(tm_eff)
    else:
        tm_eff, tk, nk = tm_t, tk_t, nk_t
        need = need_tiled(tm_eff, tk)

    # never clamp the limit below the actual need; tile sizes were shrunk above.
    vmem_limit = int(min(cap, max(need + (4 << 20), 32 << 20)))

    # ---- input prep (no host-side cast; pad only when required) ------------
    M_p = _round_up(M, tm_eff)
    x2d = x.reshape(M, dim_in)
    if M_p != M or dim_in_p != dim_in:
        x2d = jnp.pad(x2d, ((0, M_p - M), (0, dim_in_p - dim_in)))

    m_tiles = M_p // tm_eff
    n_tiles = dim_out_p // tn

    if use_resident:
        kernel = functools.partial(_glu_resident_kernel, approximate=approximate_gelu)
        out_p = pl.pallas_call(
            kernel,
            out_shape=jax.ShapeDtypeStruct((M_p, dim_out_p), out_dtype),
            grid_spec=pltpu.PrefetchScalarGridSpec(
                num_scalar_prefetch=0,
                grid=(m_tiles,),
                in_specs=[
                    pl.BlockSpec((tm_eff, dim_in_p), lambda i: (i, 0)),
                    # constant index map -> weights DMA'd from HBM exactly once
                    pl.BlockSpec((dim_in_p, dim_out_p), lambda i: (0, 0)),
                    pl.BlockSpec((dim_in_p, dim_out_p), lambda i: (0, 0)),
                    pl.BlockSpec((1, dim_out_p), lambda i: (0, 0)),
                    pl.BlockSpec((1, dim_out_p), lambda i: (0, 0)),
                ],
                out_specs=pl.BlockSpec((tm_eff, dim_out_p), lambda i: (i, 0)),
            ),
            compiler_params=pltpu.CompilerParams(
                dimension_semantics=("parallel",),
                vmem_limit_bytes=vmem_limit,
            ),
        )(x2d, w_x, w_g, b_x, b_g)
    else:
        kernel = functools.partial(_glu_tiled_kernel, approximate=approximate_gelu)
        if n_tiles == 1:
            # single column tile: put the large row axis outermost so v7x
            # megacore sharding stays balanced (weight is j-constant anyway).
            grid = (m_tiles, n_tiles, nk)
            x_map = lambda i, j, k: (i, k)
            w_map = lambda i, j, k: (k, j)
            b_map = lambda i, j, k: (0, j)
            o_map = lambda i, j, k: (i, j)
        else:
            # column tiles outermost: (tk, tn) weight blocks don't depend on the
            # row axis, so they stay VMEM-resident across every row tile.
            grid = (n_tiles, m_tiles, nk)
            x_map = lambda j, i, k: (i, k)
            w_map = lambda j, i, k: (k, j)
            b_map = lambda j, i, k: (0, j)
            o_map = lambda j, i, k: (i, j)
        out_p = pl.pallas_call(
            kernel,
            out_shape=jax.ShapeDtypeStruct((M_p, dim_out_p), out_dtype),
            grid_spec=pltpu.PrefetchScalarGridSpec(
                num_scalar_prefetch=0,
                grid=grid,
                in_specs=[
                    pl.BlockSpec((tm_eff, tk), x_map),
                    pl.BlockSpec((tk, tn), w_map),
                    pl.BlockSpec((tk, tn), w_map),
                    pl.BlockSpec((1, tn), b_map),
                    pl.BlockSpec((1, tn), b_map),
                ],
                out_specs=pl.BlockSpec((tm_eff, tn), o_map),
                scratch_shapes=[pltpu.VMEM((tm_eff, tn), jnp.float32),
                                pltpu.VMEM((tm_eff, tn), jnp.float32)],
            ),
            compiler_params=pltpu.CompilerParams(
                dimension_semantics=("parallel", "parallel", "arbitrary"),
                vmem_limit_bytes=vmem_limit,
            ),
        )(x2d, w_x, w_g, b_x, b_g)

    return out_p[:M, :dim_out].reshape(*lead, dim_out)


def glu_forward_channel_first(x_nchw, params, **kwargs):
    """Conv2d-1x1 (channel_first) branch: same math over the channel axis."""
    # TODO(synk): keep NHWC end-to-end (or fold the layout change into the
    # BlockSpecs) to avoid these two full-HBM transposes of the activation.
    x_nhwc = jnp.transpose(x_nchw, (0, 2, 3, 1))
    out = glu_forward(x_nhwc, params, **kwargs)
    return jnp.transpose(out, (0, 3, 1, 2))


# --------------------------------------------------------------------------
# Reference + self-test
# --------------------------------------------------------------------------
def _reference(x, weight, bias, dim_out):
    proj = jnp.einsum("...d,od->...o", x, weight) + bias
    xp, gate = proj[..., :dim_out], proj[..., dim_out:]
    g = 0.5 * gate * (1.0 + lax.erf(gate * jnp.float32(_INV_SQRT2)))
    return xp * g


if __name__ == "__main__":
    key = jax.random.PRNGKey(0)
    B, N, dim_in, dim_out = 2, 8, 32, 64
    proj_out = 2 * dim_out

    kx, kw, kb, ki = jax.random.split(key, 4)
    x = jax.random.normal(kx, (B, N, dim_in), dtype=jnp.float32)

    bound = 1.0 / math.sqrt(dim_in)
    weight = jax.random.uniform(kw, (proj_out, dim_in), jnp.float32, -bound, bound)
    bias = jax.random.uniform(kb, (proj_out,), jnp.float32, -bound, bound)

    params = prepare_glu_params(weight, bias, dim_out)      # packed + cast once

    out = jax.block_until_ready(glu_forward(x, params))                  # resident path
    out_tiled = jax.block_until_ready(glu_forward(x, params, strategy="tiled"))
    assert out.shape == (B, N, dim_out)
    assert out_tiled.shape == (B, N, dim_out)

    # Reference with the same bf16 operand rounding (f32 accumulation) — tight.
    xb = x.astype(jnp.bfloat16).astype(jnp.float32)
    wb = weight.astype(jnp.bfloat16).astype(jnp.float32)
    ref_b = _reference(xb, wb, bias, dim_out)
    assert jnp.allclose(out, ref_b, atol=2e-3, rtol=2e-3), "resident path mismatch"
    assert jnp.allclose(out_tiled, ref_b, atol=2e-3, rtol=2e-3), "tiled path mismatch"

    # Full-precision module semantics — loose tolerance for bf16 operands.
    ref = _reference(x, weight, bias, dim_out)
    assert jnp.allclose(out, ref, atol=5e-2, rtol=5e-2), "mismatch vs f32 reference"

    # channel_first (Conv2d 1x1) branch.
    x_img = jax.random.normal(ki, (2, dim_in, 4, 4), dtype=jnp.float32)
    out_img = jax.block_until_ready(glu_forward_channel_first(x_img, params))
    assert out_img.shape == (2, dim_out, 4, 4)
    ref_img = jnp.transpose(
        _reference(jnp.transpose(x_img, (0, 2, 3, 1)), weight, bias, dim_out),
        (0, 3, 1, 2))
    assert jnp.allclose(out_img, ref_img, atol=5e-2, rtol=5e-2), "channel_first mismatch"

    print("KERNEL_OK")
</pallas_src>

<mosaic_0001>
module attributes {stable_mosaic.version = 11 : i64} {
  func.func @_glu_resident_kernel(%arg0: i32, %arg1: memref<16x128xf32, #tpu.memory_space<vmem>>, %arg2: memref<128x128xbf16, #tpu.memory_space<vmem>>, %arg3: memref<128x128xbf16, #tpu.memory_space<vmem>>, %arg4: memref<1x128xf32, #tpu.memory_space<vmem>>, %arg5: memref<1x128xf32, #tpu.memory_space<vmem>>, %arg6: memref<16x128xf32, #tpu.memory_space<vmem>>) attributes {dimension_semantics = [#tpu.dimension_semantics<parallel>], iteration_bounds = array<i64: 1>, scalar_prefetch = 0 : i64, scratch_operands = 0 : i64, tpu.core_type = #tpu.core_type<tc>, window_params = [{transform_indices = @transform_0, window_bounds = array<i64: 16, 128>}, {pipeline_mode = #tpu.pipeline_mode<synchronous>, transform_indices = @transform_1, window_bounds = array<i64: 128, 128>}, {pipeline_mode = #tpu.pipeline_mode<synchronous>, transform_indices = @transform_2, window_bounds = array<i64: 128, 128>}, {pipeline_mode = #tpu.pipeline_mode<synchronous>, transform_indices = @transform_3, window_bounds = array<i64: 1, 128>}, {pipeline_mode = #tpu.pipeline_mode<synchronous>, transform_indices = @transform_4, window_bounds = array<i64: 1, 128>}, {transform_indices = @transform_5, window_bounds = array<i64: 16, 128>}]} {
    %c0 = arith.constant 0 : index
    %c0_0 = arith.constant 0 : index
    %0 = vector.load %arg1[%c0, %c0_0] : memref<16x128xf32, #tpu.memory_space<vmem>>, vector<16x128xf32>
    %1 = arith.truncf %0 : vector<16x128xf32> to vector<16x128xbf16>
    %c0_1 = arith.constant 0 : index
    %c0_2 = arith.constant 0 : index
    %2 = vector.load %arg2[%c0_1, %c0_2] : memref<128x128xbf16, #tpu.memory_space<vmem>>, vector<128x128xbf16>
    %cst = arith.constant dense<0.000000e+00> : vector<16x128xf32>
    %3 = tpu.matmul %1, %2, %cst {dimension_numbers = #tpu.dot_dimension_numbers<[1], [0], [0], [1], [0, 0, 1, 1], [], []>} : vector<16x128xbf16>, vector<128x128xbf16>, vector<16x128xf32> -> vector<16x128xf32>
    %c0_3 = arith.constant 0 : index
    %c0_4 = arith.constant 0 : index
    %4 = vector.load %arg4[%c0_3, %c0_4] : memref<1x128xf32, #tpu.memory_space<vmem>>, vector<1x128xf32>
    %5 = vector.broadcast %4 : vector<1x128xf32> to vector<16x128xf32>
    %6 = arith.addf %3, %5 : vector<16x128xf32>
    %c0_5 = arith.constant 0 : index
    %c0_6 = arith.constant 0 : index
    %7 = vector.load %arg3[%c0_5, %c0_6] : memref<128x128xbf16, #tpu.memory_space<vmem>>, vector<128x128xbf16>
    %cst_7 = arith.constant dense<0.000000e+00> : vector<16x128xf32>
    %8 = tpu.matmul %1, %7, %cst_7 {dimension_numbers = #tpu.dot_dimension_numbers<[1], [0], [0], [1], [0, 0, 1, 1], [], []>} : vector<16x128xbf16>, vector<128x128xbf16>, vector<16x128xf32> -> vector<16x128xf32>
    %c0_8 = arith.constant 0 : index
    %c0_9 = arith.constant 0 : index
    %9 = vector.load %arg5[%c0_8, %c0_9] : memref<1x128xf32, #tpu.memory_space<vmem>>, vector<1x128xf32>
    %10 = vector.broadcast %9 : vector<1x128xf32> to vector<16x128xf32>
    %11 = arith.addf %8, %10 : vector<16x128xf32>
    %cst_10 = arith.constant 5.000000e-01 : f32
    %12 = vector.broadcast %cst_10 : f32 to vector<16x128xf32>
    %13 = arith.mulf %12, %11 : vector<16x128xf32>
    %cst_11 = arith.constant 0.707106769 : f32
    %14 = vector.broadcast %cst_11 : f32 to vector<16x128xf32>
    %15 = arith.mulf %11, %14 : vector<16x128xf32>
    %16 = math.erf %15 : vector<16x128xf32>
    %cst_12 = arith.constant 1.000000e+00 : f32
    %17 = vector.broadcast %cst_12 : f32 to vector<16x128xf32>
    %18 = arith.addf %17, %16 : vector<16x128xf32>
    %19 = arith.mulf %13, %18 : vector<16x128xf32>
    %20 = arith.mulf %6, %19 : vector<16x128xf32>
    %c0_13 = arith.constant 0 : index
    %c0_14 = arith.constant 0 : index
    %21 = vector.load %arg6[%c0_13, %c0_14] : memref<16x128xf32, #tpu.memory_space<vmem>>, vector<16x128xf32>
    tpu.vector_store %arg6[%c0_13, %c0_14], %20 {strides = array<i32>} : memref<16x128xf32, #tpu.memory_space<vmem>>, vector<16x128xf32>,
    return
  }
  func.func @transform_0(%arg0: i32) -> (i32, i32) {
    %c0_i32 = arith.constant 0 : i32
    %c0_i32_0 = arith.constant 0 : i32
    return %arg0, %c0_i32 : i32, i32
  }
  func.func @transform_1(%arg0: i32) -> (i32, i32) {
    %c0_i32 = arith.constant 0 : i32
    %c0_i32_0 = arith.constant 0 : i32
    %c0_i32_1 = arith.constant 0 : i32
    return %c0_i32, %c0_i32_0 : i32, i32
  }
  func.func @transform_2(%arg0: i32) -> (i32, i32) {
    %c0_i32 = arith.constant 0 : i32
    %c0_i32_0 = arith.constant 0 : i32
    %c0_i32_1 = arith.constant 0 : i32
    return %c0_i32, %c0_i32_0 : i32, i32
  }
  func.func @transform_3(%arg0: i32) -> (i32, i32) {
    %c0_i32 = arith.constant 0 : i32
    %c0_i32_0 = arith.constant 0 : i32
    %c0_i32_1 = arith.constant 0 : i32
    return %c0_i32, %c0_i32_0 : i32, i32
  }
  func.func @transform_4(%arg0: i32) -> (i32, i32) {
    %c0_i32 = arith.constant 0 : i32
    %c0_i32_0 = arith.constant 0 : i32
    %c0_i32_1 = arith.constant 0 : i32
    return %c0_i32, %c0_i32_0 : i32, i32
  }
  func.func @transform_5(%arg0: i32) -> (i32, i32) {
    %c0_i32 = arith.constant 0 : i32
    %c0_i32_0 = arith.constant 0 : i32
    return %arg0, %c0_i32 : i32, i32
  }
}

</mosaic_0001>

<llo_original>
// kernel: tpu_custom_call.1
$region0: #{tpu_custom_call.1}
  #allocation0 [shape = 'u32[]', space=smem, size = 0x4, offset = 0x4, fixed_abs, tag = 'smem constant byte address 0x4 - core index']
  #allocation1 [shape = 'u32[144,128]{1,0:T(1,128)}', space=vmem, size = 0x12000, scoped, tag = 'internal scratch']
  %s0 = inlined_call_operand.hbm [shape: f32[16,128], index: 0, kind: input, shape index: {}]
  %s1 = inlined_call_operand.hbm [shape: bf16[128,128], index: 1, kind: input, shape index: {}]
  %s2 = inlined_call_operand.hbm [shape: bf16[128,128], index: 2, kind: input, shape index: {}]
  %s3 = inlined_call_operand.vmem [shape: f32[1,128], index: 3, kind: input, shape index: {}]
  %s4 = inlined_call_operand.vmem [shape: f32[1,128], index: 4, kind: input, shape index: {}]
  %s5 = inlined_call_operand.hbm [shape: f32[16,128], index: 5, kind: output, shape index: {}]
  %s6 = sld [smem:[#allocation0]]
  $region42: #{tpu_custom_call.1} parent=0
    _
  %s8 = ssub.s32 1, %s6
  %s9 = scalar_select 0, %s8, %s6
  $region1: #{tpu_custom_call.1} parent=0
    #allocation2 [shape = 'u8[8192]{0}', space=vmem, size = 0x2000, scoped, tag = 'input window, operand 0, single buffered']
    #allocation3 [shape = 's32[1]{0}', space=sflag, size = 0x4, scoped, tag = 'scoped memory for tpu_custom_call.1']
    #allocation4 [shape = 's32[1]{0}', space=sflag, size = 0x4, scoped, tag = 'scoped memory for tpu_custom_call.1']
    #allocation5 [shape = 'u8[32768]{0}', space=vmem, size = 0x8000, scoped, tag = 'input window, operand 1, single buffered']
    #allocation6 [shape = 's32[1]{0}', space=sflag, size = 0x4, scoped, tag = 'scoped memory for tpu_custom_call.1']
    #allocation7 [shape = 'u8[32768]{0}', space=vmem, size = 0x8000, scoped, tag = 'input window, operand 2, single buffered']
    #allocation8 [shape = 'u8[8192]{0}', space=vmem, size = 0x2000, scoped, tag = 'output window, operand 0, single buffered']
    %10 = vsyncpa [#allocation3], 0
    %11 = vsyncpa [#allocation6], 0
    %12 = vsyncpa [#allocation4], 0
    // Predicated region
    $region2: #{tpu_custom_call.1} parent=1 // pred_check
      _
    $region3: #{tpu_custom_call.1} parent=1 // pred_check_branch
      %14 = sbr.rel (0) target = $region5
    $region4: #{tpu_custom_call.1} parent=1 // pred_region
      %s16 = ssub.s32 256, 256
      %17 = vsyncadd [#allocation3], %s16
      %s18 = sshll.u32 [#allocation2], 4
      %s19 = int_to_ptr.vmem [resolvable:$true] %s18
      %24 = dma.hbm_to_vmem [thread:$0]  %s0, 256, %s19, [#allocation3], 128, 128, 8
    $region5: #{tpu_custom_call.1} parent=1 // pred_fallthru
      _
    // Predicated region
    $region6: #{tpu_custom_call.1} parent=1 // pred_check
      _
    $region7: #{tpu_custom_call.1} parent=1 // pred_check_branch
      %26 = sbr.rel (0) target = $region9
    $region8: #{tpu_custom_call.1} parent=1 // pred_region
      %s28 = ssub.s32 1024, 1024
      %29 = vsyncadd [#allocation6], %s28
      %s30 = sshll.u32 [#allocation5], 4
      %s31 = int_to_ptr.vmem [resolvable:$true] %s30
      %36 = dma.hbm_to_vmem [thread:$0]  %s1, 1024, %s31, [#allocation6], 64, 64, 4
    $region9: #{tpu_custom_call.1} parent=1 // pred_fallthru
      _
    // Predicated region
    $region10: #{tpu_custom_call.1} parent=1 // pred_check
      _
    $region11: #{tpu_custom_call.1} parent=1 // pred_check_branch
      %38 = sbr.rel (0) target = $region13
    $region12: #{tpu_custom_call.1} parent=1 // pred_region
      %s40 = ssub.s32 1024, 1024
      %41 = vsyncadd [#allocation6], %s40
      %s42 = sshll.u32 [#allocation7], 4
      %s43 = int_to_ptr.vmem [resolvable:$true] %s42
      %48 = dma.hbm_to_vmem [thread:$0]  %s2, 1024, %s43, [#allocation6], 64, 64, 4
    $region13: #{tpu_custom_call.1} parent=1 // pred_fallthru
      _
    // Predicated region
    $region14: #{tpu_custom_call.1} parent=1 // pred_check
      _
    $region15: #{tpu_custom_call.1} parent=1 // pred_check_branch
      %50 = sbr.rel (0) target = $region17
    $region16: #{tpu_custom_call.1} parent=1 // pred_region
      _
    $region17: #{tpu_custom_call.1} parent=1 // pred_fallthru
      _
    // Predicated region
    $region18: #{tpu_custom_call.1} parent=1 // pred_check
      _
    $region19: #{tpu_custom_call.1} parent=1 // pred_check_branch
      %52 = sbr.rel (0) target = $region21
    $region20: #{tpu_custom_call.1} parent=1 // pred_region
      _
    $region21: #{tpu_custom_call.1} parent=1 // pred_fallthru
      _
    // Predicated region
    $region22: #{tpu_custom_call.1} parent=1 // pred_check
      _
    $region23: #{tpu_custom_call.1} parent=1 // pred_check_branch
      %54 = sbr.rel (0) target = $region25
    $region24: #{tpu_custom_call.1} parent=1 // pred_region
      %55 = dma.done [#allocation3], 256
    $region25: #{tpu_custom_call.1} parent=1 // pred_fallthru
      _
    // Predicated region
    $region26: #{tpu_custom_call.1} parent=1 // pred_check
      _
    $region27: #{tpu_custom_call.1} parent=1 // pred_check_branch
      %57 = sbr.rel (0) target = $region29
    $region28: #{tpu_custom_call.1} parent=1 // pred_region
      %58 = dma.done [#allocation6], 1024
    $region29: #{tpu_custom_call.1} parent=1 // pred_fallthru
      _
    // Predicated region
    $region30: #{tpu_custom_call.1} parent=1 // pred_check
      _
    $region31: #{tpu_custom_call.1} parent=1 // pred_check_branch
      %60 = sbr.rel (0) target = $region33
    $region32: #{tpu_custom_call.1} parent=1 // pred_region
      %61 = dma.done [#allocation6], 1024
    $region33: #{tpu_custom_call.1} parent=1 // pred_fallthru
      _
    %v63 = vld [vmem:[#allocation2] sm:$0xff]
    %v64 = vld [vmem:[#allocation2 + $0x8] sm:$0xff]
    %v65 = vpack.c.bf16 %v64, %v63
    %v66 = vld [vmem:[#allocation5] sm:$0xf]
    %v67 = vld [vmem:[#allocation5 + $0x4] sm:$0xf]
    %v68 = vld [vmem:[#allocation5 + $0x8] sm:$0xf]
    %v69 = vld [vmem:[#allocation5 + $0xc] sm:$0xf]
    %v70 = vld [vmem:[#allocation5 + $0x10] sm:$0xf]
    %v71 = vld [vmem:[#allocation5 + $0x14] sm:$0xf]
    %v72 = vld [vmem:[#allocation5 + $0x18] sm:$0xf]
    %v73 = vld [vmem:[#allocation5 + $0x1c] sm:$0xf]
    %v74 = vld [vmem:[#allocation5 + $0x20] sm:$0xf]
    %v75 = vld [vmem:[#allocation5 + $0x24] sm:$0xf]
    %v76 = vld [vmem:[#allocation5 + $0x28] sm:$0xf]
    %v77 = vld [vmem:[#allocation5 + $0x2c] sm:$0xf]
    %v78 = vld [vmem:[#allocation5 + $0x30] sm:$0xf]
    %v79 = vld [vmem:[#allocation5 + $0x34] sm:$0xf]
    %v80 = vld [vmem:[#allocation5 + $0x38] sm:$0xf]
    %v81 = vld [vmem:[#allocation5 + $0x3c] sm:$0xf]
    %v82 = vld [vmem:[%s3] sm:$0x1]
    %v84 = vlaneseq
    %v85 = vshrl.u32 %v84, 7
    %v86 = vsub.s32 0, %v85
    %v87 = vrot.slane %v82, %v86
    %v105 = vunpack.c.l.b16 %v66
    %v106 = vunpack.c.l.b16 %v67
    %v107 = vunpack.c.l.b16 %v68
    %v108 = vunpack.c.l.b16 %v69
    %v109 = vunpack.c.l.b16 %v70
    %v110 = vunpack.c.l.b16 %v71
    %v111 = vunpack.c.l.b16 %v72
    %v112 = vunpack.c.l.b16 %v73
    %v113 = vunpack.c.l.b16 %v74
    %v114 = vunpack.c.l.b16 %v75
    %v115 = vunpack.c.l.b16 %v76
    %v116 = vunpack.c.l.b16 %v77
    %v117 = vunpack.c.l.b16 %v78
    %v118 = vunpack.c.l.b16 %v79
    %v119 = vunpack.c.l.b16 %v80
    %v120 = vunpack.c.l.b16 %v81
    %v121 = vpack.c.b16 %v106, %v105
    %v122 = vpack.c.b16 %v108, %v107
    %v123 = vpack.c.b16 %v110, %v109
    %v124 = vpack.c.b16 %v112, %v111
    %v125 = vpack.c.b16 %v114, %v113
    %v126 = vpack.c.b16 %v116, %v115
    %v127 = vpack.c.b16 %v118, %v117
    %v128 = vpack.c.b16 %v120, %v119
    %137 = vmatprep.subr.bf16.mxu0 0
    %138 = vmatpush1.bf16.msra.mxu0 %v121
    %139 = vmatprep.subr.bf16.mxu0 0
    %140 = vmatpush1.bf16.msra.mxu0 %v122
    %141 = vmatprep.subr.bf16.mxu0 0
    %142 = vmatpush1.bf16.msra.mxu0 %v123
    %143 = vmatprep.subr.bf16.mxu0 0
    %144 = vmatpush1.bf16.msra.mxu0 %v124
    %145 = vmatprep.subr.bf16.mxu0 0
    %146 = vmatpush1.bf16.msra.mxu0 %v125
    %147 = vmatprep.subr.bf16.mxu0 0
    %148 = vmatpush1.bf16.msra.mxu0 %v126
    %149 = vmatprep.subr.bf16.mxu0 0
    %150 = vmatpush1.bf16.msra.mxu0 %v127
    %151 = vmatprep.subr.bf16.mxu0 0
    %152 = vmatpush1.bf16.msra.mxu0 %v128
    %153 = vmatprep.subr.bf16.mxu0 0
    %154 = vmatpush1.bf16.msra.mxu0 0
    %155 = vmatprep.subr.bf16.mxu0 0
    %156 = vmatpush1.bf16.msra.mxu0 0
    %157 = vmatprep.subr.bf16.mxu0 0
    %158 = vmatpush1.bf16.msra.mxu0 0
    %159 = vmatprep.subr.bf16.mxu0 0
    %160 = vmatpush1.bf16.msra.mxu0 0
    %161 = vmatprep.subr.bf16.mxu0 0
    %162 = vmatpush1.bf16.msra.mxu0 0
    %163 = vmatprep.subr.bf16.mxu0 0
    %164 = vmatpush1.bf16.msra.mxu0 0
    %165 = vmatprep.subr.bf16.mxu0 0
    %166 = vmatpush1.bf16.msra.mxu0 0
    %167 = vmatprep.subr.bf16.mxu0 0
    %168 = vmatpush1.bf16.msra.mxu0 0
    %169 = vmatprep.mubr.bf16.mxu0 0
    %170 = vmatmul.mubr.bf16.gmra.mrb[0].mxu0 %v65
    %v171 = vpop.f32.mrb[0].mxu0
    %v172 = vadd.f32 %v87, %v171
    %v173 = vpop.f32.mrb[0].mxu0
    %v174 = vpop.f32.mrb[0].mxu0
    %v175 = vadd.f32 %v87, %v174
    %v176 = vpop.f32.mrb[0].mxu0
    %177 = vdwg.mxu0
    %v178 = vld [vmem:[#allocation7] sm:$0xf]
    %v179 = vld [vmem:[#allocation7 + $0x4] sm:$0xf]
    %v180 = vld [vmem:[#allocation7 + $0x8] sm:$0xf]
    %v181 = vld [vmem:[#allocation7 + $0xc] sm:$0xf]
    %v182 = vld [vmem:[#allocation7 + $0x10] sm:$0xf]
    %v183 = vld [vmem:[#allocation7 + $0x14] sm:$0xf]
    %v184 = vld [vmem:[#allocation7 + $0x18] sm:$0xf]
    %v185 = vld [vmem:[#allocation7 + $0x1c] sm:$0xf]
    %v186 = vld [vmem:[#allocation7 + $0x20] sm:$0xf]
    %v187 = vld [vmem:[#allocation7 + $0x24] sm:$0xf]
    %v188 = vld [vmem:[#allocation7 + $0x28] sm:$0xf]
    %v189 = vld [vmem:[#allocation7 + $0x2c] sm:$0xf]
    %v190 = vld [vmem:[#allocation7 + $0x30] sm:$0xf]
    %v191 = vld [vmem:[#allocation7 + $0x34] sm:$0xf]
    %v192 = vld [vmem:[#allocation7 + $0x38] sm:$0xf]
    %v193 = vld [vmem:[#allocation7 + $0x3c] sm:$0xf]
    %v194 = vld [vmem:[%s4] sm:$0x1]
    %v196 = vlaneseq
    %v197 = vshrl.u32 %v196, 7
    %v198 = vsub.s32 0, %v197
    %v199 = vrot.slane %v194, %v198
    %v217 = vunpack.c.l.b16 %v178
    %v218 = vunpack.c.l.b16 %v179
    %v219 = vunpack.c.l.b16 %v180
    %v220 = vunpack.c.l.b16 %v181
    %v221 = vunpack.c.l.b16 %v182
    %v222 = vunpack.c.l.b16 %v183
    %v223 = vunpack.c.l.b16 %v184
    %v224 = vunpack.c.l.b16 %v185
    %v225 = vunpack.c.l.b16 %v186
    %v226 = vunpack.c.l.b16 %v187
    %v227 = vunpack.c.l.b16 %v188
    %v228 = vunpack.c.l.b16 %v189
    %v229 = vunpack.c.l.b16 %v190
    %v230 = vunpack.c.l.b16 %v191
    %v231 = vunpack.c.l.b16 %v192
    %v232 = vunpack.c.l.b16 %v193
    %v233 = vpack.c.b16 %v218, %v217
    %v234 = vpack.c.b16 %v220, %v219
    %v235 = vpack.c.b16 %v222, %v221
    %v236 = vpack.c.b16 %v224, %v223
    %v237 = vpack.c.b16 %v226, %v225
    %v238 = vpack.c.b16 %v228, %v227
    %v239 = vpack.c.b16 %v230, %v229
    %v240 = vpack.c.b16 %v232, %v231
    %249 = vmatprep.subr.bf16.mxu0 0
    %250 = vmatpush1.bf16.msra.mxu0 %v233
    %251 = vmatprep.subr.bf16.mxu0 0
    %252 = vmatpush1.bf16.msra.mxu0 %v234
    %253 = vmatprep.subr.bf16.mxu0 0
    %254 = vmatpush1.bf16.msra.mxu0 %v235
    %255 = vmatprep.subr.bf16.mxu0 0
    %256 = vmatpush1.bf16.msra.mxu0 %v236
    %257 = vmatprep.subr.bf16.mxu0 0
    %258 = vmatpush1.bf16.msra.mxu0 %v237
    %259 = vmatprep.subr.bf16.mxu0 0
    %260 = vmatpush1.bf16.msra.mxu0 %v238
    %261 = vmatprep.subr.bf16.mxu0 0
    %262 = vmatpush1.bf16.msra.mxu0 %v239
    %263 = vmatprep.subr.bf16.mxu0 0
    %264 = vmatpush1.bf16.msra.mxu0 %v240
    %265 = vmatprep.subr.bf16.mxu0 0
    %266 = vmatpush1.bf16.msra.mxu0 0
    %267 = vmatprep.subr.bf16.mxu0 0
    %268 = vmatpush1.bf16.msra.mxu0 0
    %269 = vmatprep.subr.bf16.mxu0 0
    %270 = vmatpush1.bf16.msra.mxu0 0
    %271 = vmatprep.subr.bf16.mxu0 0
    %272 = vmatpush1.bf16.msra.mxu0 0
    %273 = vmatprep.subr.bf16.mxu0 0
    %274 = vmatpush1.bf16.msra.mxu0 0
    %275 = vmatprep.subr.bf16.mxu0 0
    %276 = vmatpush1.bf16.msra.mxu0 0
    %277 = vmatprep.subr.bf16.mxu0 0
    %278 = vmatpush1.bf16.msra.mxu0 0
    %279 = vmatprep.subr.bf16.mxu0 0
    %280 = vmatpush1.bf16.msra.mxu0 0
    %281 = vmatprep.mubr.bf16.mxu0 0
    %282 = vmatmul.mubr.bf16.gmra.mrb[0].mxu0 %v65
    %v283 = vpop.f32.mrb[0].mxu0
    %v284 = vadd.f32 %v199, %v283
    %v285 = vpop.f32.mrb[0].mxu0
    %v286 = vpop.f32.mrb[0].mxu0
    %v287 = vadd.f32 %v199, %v286
    %v288 = vpop.f32.mrb[0].mxu0
    %289 = vdwg.mxu0
    %v290 = vmul.f32 %v284, 0.5
    %v291 = vmul.f32 %v287, 0.5
    %v292 = vmul.f32 %v284, 0.70710677
    %v293 = vmul.f32 %v287, 0.70710677
    %v294 = verf.f32.pop %v292
    %v295 = verf.f32.pop %v293
    %v296 = vadd.f32 %v294, 1.0
    %v297 = vadd.f32 %v295, 1.0
    %v298 = vmul.f32 %v290, %v296
    %v299 = vmul.f32 %v291, %v297
    %v300 = vmul.f32 %v172, %v298
    %v301 = vmul.f32 %v175, %v299
    %302 = vst [vmem:[#allocation8] sm:$0xff] %v300
    %303 = vst [vmem:[#allocation8 + $0x8] sm:$0xff] %v301
    // Predicated region
    $region34: #{tpu_custom_call.1} parent=1 // pred_check
      _
    $region35: #{tpu_custom_call.1} parent=1 // pred_check_branch
      %305 = sbr.rel (0) target = $region37
    $region36: #{tpu_custom_call.1} parent=1 // pred_region
      %s307 = ssub.s32 256, 256
      %308 = vsyncadd [#allocation4], %s307
      %s309 = sshll.u32 [#allocation8], 4
      %s310 = int_to_ptr.vmem [resolvable:$true] %s309
      %315 = dma.vmem_to_hbm [thread:$0]  %s310, 256, %s5, [#allocation4], 128, 128, 8
    $region37: #{tpu_custom_call.1} parent=1 // pred_fallthru
      _
    // Predicated region
    $region38: #{tpu_custom_call.1} parent=1 // pred_check
      _
    $region39: #{tpu_custom_call.1} parent=1 // pred_check_branch
      %317 = sbr.rel (0) target = $region41
    $region40: #{tpu_custom_call.1} parent=1 // pred_region
      %318 = dma.done [#allocation4], 256
    $region41: #{tpu_custom_call.1} parent=1 // pred_fallthru
      _
    %319 = vsyncpa [#allocation3], 1
    %320 = vsyncpa [#allocation6], 1
    %321 = vsyncpa [#allocation4], 1

</llo_original>
